<compile_context>
chip_gen: v7x
topology: tpu7x:2x2x1
jax: 0.10.0
libtpu: 0.0.40
codegen_flags: <defaults>
</compile_context>

<pallas_src>
import functools

import jax
import jax.numpy as jnp
import numpy as np
from jax.experimental import pallas as pl
from jax.experimental.pallas import tpu as pltpu


def mha_fused_kernel(attr_ref, attn_ref, w_ref, b_ref, out_ref, *, block_bs):
    # attr_ref: [block_bs, n_heads*cdf, sourceL]  bf16   (channel index = c*n_heads + head)
    # attn_ref: [block_bs, sourceL, queryL]       bf16
    # w_ref   : [cdf, n_heads*cdf]                bf16   (fused conv1x1 + Linear weight)
    # b_ref   : [cdf, 1]                          f32    (Linear bias)
    # out_ref : [block_bs, cdf, queryL]           f32
    w = w_ref[...]
    bias = b_ref[...]
    for b in range(block_bs):  # static unroll; block_bs is tiny
        t = jnp.dot(w, attr_ref[b], preferred_element_type=jnp.float32)       # [cdf, sourceL]
        o = jnp.dot(t.astype(jnp.bfloat16), attn_ref[b],
                    preferred_element_type=jnp.float32)                        # [cdf, queryL]
        out_ref[b] = o + bias                                                  # f32 epilogue


def _pick_batch_block(bs: int, max_block: int = 8) -> int:
    # Amortize per-grid-step overhead, but keep >= 2 grid steps when bs >= 2 so the
    # two TensorCores on v7x both get a "parallel" block.
    target = max(1, bs // 2)
    for bb in range(min(target, max_block), 0, -1):
        if bs % bb == 0:
            return bb
    return 1


def multi_head_attention(seg, attr_emb, conv_w, proj_w, proj_b, *, n_heads, block_bs=None):
    """Landscape-mode forward of MultiHeadAttention.

    seg      : [bs, idf, ih, iw]            (float32)
    attr_emb : [bs, cdf, sourceL, n_heads]  (float32), sourceL == idf in landscape mode
    conv_w   : [n_heads, cdf, cdf]          (1x1 conv weights, out x in, bias=False)
    proj_w   : [cdf, n_heads*cdf]           (nn.Linear weight)
    proj_b   : [cdf]                        (nn.Linear bias)
    returns (weightedContext [bs, cdf, ih, iw], attn [bs, idf, ih, iw])
    """
    bs, idf, ih, iw = seg.shape
    cdf = attr_emb.shape[1]
    sourceL = attr_emb.shape[2]
    queryL = ih * iw

    # TODO(synk): the 'vip' dataset branch needs the external part2attr_np lookup
    # table (torch.nonzero scatter); only the 'landscape' branch (attn = seg) is implemented.
    attn_f32 = seg.reshape(bs, idf, queryL).astype(jnp.float32)     # [bs, sourceL, queryL]

    # --- trace-time weight fusion (batch-independent, exact in f32) -------------------
    # Wf[i, o, c] = sum_m proj_w[o, i*cdf + m] * conv_w[i, m, c]
    pw = proj_w.astype(jnp.float32).reshape(cdf, n_heads, cdf)              # [o, i, m]
    wf = jnp.einsum('oim,imc->ioc', pw, conv_w.astype(jnp.float32))         # [i, o, c]
    # Column order (c*n_heads + i) so attr_emb only needs a minor-dims swap.
    w_fused = jnp.transpose(wf, (1, 2, 0)).reshape(cdf, cdf * n_heads)      # [o, c*nh+i]

    # attr_flat[b, c*n_heads + i, s] = attr_emb[b, c, s, i]  (last-two-dims swap only)
    attr_flat = jnp.swapaxes(attr_emb, 2, 3).reshape(bs, cdf * n_heads, sourceL)

    # bf16 matmul operands, f32 bias.
    attn_bf = attn_f32.astype(jnp.bfloat16)
    attr_bf = attr_flat.astype(jnp.bfloat16)
    w_bf = w_fused.astype(jnp.bfloat16)
    bias_f32 = proj_b.reshape(cdf, 1).astype(jnp.float32)

    if block_bs is None:
        block_bs = _pick_batch_block(bs)
    assert bs % block_bs == 0, "block_bs must divide bs"
    grid = (bs // block_bs,)

    kernel = functools.partial(mha_fused_kernel, block_bs=block_bs)
    out = pl.pallas_call(
        kernel,
        out_shape=jax.ShapeDtypeStruct((bs, cdf, queryL), jnp.float32),
        grid_spec=pltpu.PrefetchScalarGridSpec(
            num_scalar_prefetch=0,
            grid=grid,
            in_specs=[
                pl.BlockSpec((block_bs, cdf * n_heads, sourceL), lambda b: (b, 0, 0)),
                pl.BlockSpec((block_bs, sourceL, queryL), lambda b: (b, 0, 0)),
                pl.BlockSpec((cdf, cdf * n_heads), lambda b: (0, 0)),
                pl.BlockSpec((cdf, 1), lambda b: (0, 0)),
            ],
            out_specs=pl.BlockSpec((block_bs, cdf, queryL), lambda b: (b, 0, 0)),
        ),
        compiler_params=pltpu.CompilerParams(dimension_semantics=("parallel",)),
    )(attr_bf, attn_bf, w_bf, bias_f32)

    weighted_context = out.reshape(bs, cdf, ih, iw)
    attn_out = attn_f32.reshape(bs, idf, ih, iw)
    return weighted_context, attn_out


def reference_forward(seg, attr_emb, conv_w, proj_w, proj_b, *, n_heads):
    """Pure-JAX f32 transcription of the PyTorch forward (landscape mode) for checking."""
    bs, idf, ih, iw = seg.shape
    cdf = attr_emb.shape[1]
    queryL = ih * iw
    attn = seg.reshape(bs, idf, queryL)
    ctx_list = []
    for i in range(n_heads):
        attr_i = attr_emb[:, :, :, i]                                  # [bs, cdf, sourceL]
        sourceT = jnp.einsum('oc,bcs->bos', conv_w[i], attr_i)         # 1x1 conv, bias=False
        wc = jnp.einsum('bcs,bsq->bcq', sourceT, attn)                 # bmm
        ctx_list.append(jnp.transpose(wc, (0, 2, 1)))                  # [bs, queryL, cdf]
    cat = jnp.concatenate(ctx_list, axis=-1)                           # [bs, queryL, n_heads*cdf]
    out = cat @ proj_w.T + proj_b                                      # nn.Linear
    out = jnp.transpose(out, (0, 2, 1)).reshape(bs, cdf, ih, iw)
    return out, attn.reshape(bs, idf, ih, iw)


if __name__ == "__main__":
    # Small, module-consistent shapes (landscape mode requires sourceL == idf).
    bs, idf, ih, iw = 2, 19, 16, 16
    cdf, n_heads = 32, 4
    sourceL = idf

    key = jax.random.PRNGKey(0)
    k_seg, k_attr, k_cw, k_pw, k_pb = jax.random.split(key, 5)

    seg = jax.random.normal(k_seg, (bs, idf, ih, iw), jnp.float32)
    attr_emb = jax.random.normal(k_attr, (bs, cdf, sourceL, n_heads), jnp.float32)

    # Deterministic synthetic parameters (conv1x1 weights squeezed from [cdf, cdf, 1, 1]).
    conv_w = 0.1 * jax.random.normal(k_cw, (n_heads, cdf, cdf), jnp.float32)
    proj_w = 0.1 * jax.random.normal(k_pw, (cdf, n_heads * cdf), jnp.float32)
    proj_b = 0.1 * jax.random.normal(k_pb, (cdf,), jnp.float32)

    wc, attn = multi_head_attention(seg, attr_emb, conv_w, proj_w, proj_b, n_heads=n_heads)
    wc = jax.block_until_ready(wc)
    attn = jax.block_until_ready(attn)

    wc_ref, attn_ref = reference_forward(seg, attr_emb, conv_w, proj_w, proj_b, n_heads=n_heads)
    # bf16 matmul operands vs f32 reference -> relaxed tolerance (f32 accumulation keeps it tight).
    np.testing.assert_allclose(np.asarray(wc), np.asarray(wc_ref), rtol=5e-2, atol=1e-1)
    np.testing.assert_allclose(np.asarray(attn), np.asarray(attn_ref), rtol=0, atol=0)

    print("KERNEL_OK")
</pallas_src>

<mosaic_0001>
module attributes {stable_mosaic.version = 11 : i64} {
  func.func @mha_fused_kernel(%arg0: i32, %arg1: memref<1x128x19xbf16, #tpu.memory_space<vmem>>, %arg2: memref<1x19x256xbf16, #tpu.memory_space<vmem>>, %arg3: memref<32x128xbf16, #tpu.memory_space<vmem>>, %arg4: memref<32x1xf32, #tpu.memory_space<vmem>>, %arg5: memref<1x32x256xf32, #tpu.memory_space<vmem>>) attributes {dimension_semantics = [#tpu.dimension_semantics<parallel>], iteration_bounds = array<i64: 2>, scalar_prefetch = 0 : i64, scratch_operands = 0 : i64, tpu.core_type = #tpu.core_type<tc>, window_params = [{transform_indices = @transform_0, window_bounds = array<i64: 1, 128, 19>}, {transform_indices = @transform_1, window_bounds = array<i64: 1, 19, 256>}, {pipeline_mode = #tpu.pipeline_mode<synchronous>, transform_indices = @transform_2, window_bounds = array<i64: 32, 128>}, {pipeline_mode = #tpu.pipeline_mode<synchronous>, transform_indices = @transform_3, window_bounds = array<i64: 32, 1>}, {transform_indices = @transform_4, window_bounds = array<i64: 1, 32, 256>}]} {
    %c0 = arith.constant 0 : index
    %c0_0 = arith.constant 0 : index
    %0 = vector.load %arg3[%c0, %c0_0] : memref<32x128xbf16, #tpu.memory_space<vmem>>, vector<32x128xbf16>
    %c0_1 = arith.constant 0 : index
    %c0_2 = arith.constant 0 : index
    %1 = vector.load %arg4[%c0_1, %c0_2] : memref<32x1xf32, #tpu.memory_space<vmem>>, vector<32x1xf32>
    %c0_3 = arith.constant 0 : index
    %c0_4 = arith.constant 0 : index
    %c0_5 = arith.constant 0 : index
    %2 = vector.load %arg1[%c0_3, %c0_4, %c0_5] : memref<1x128x19xbf16, #tpu.memory_space<vmem>>, vector<1x128x19xbf16>
    %3 = vector.shape_cast %2 : vector<1x128x19xbf16> to vector<128x19xbf16>
    %cst = arith.constant dense<0.000000e+00> : vector<32x19xf32>
    %4 = tpu.matmul %0, %3, %cst {dimension_numbers = #tpu.dot_dimension_numbers<[1], [0], [0], [1], [0, 0, 1, 1], [], []>} : vector<32x128xbf16>, vector<128x19xbf16>, vector<32x19xf32> -> vector<32x19xf32>
    %5 = arith.truncf %4 : vector<32x19xf32> to vector<32x19xbf16>
    %c0_6 = arith.constant 0 : index
    %c0_7 = arith.constant 0 : index
    %c0_8 = arith.constant 0 : index
    %6 = vector.load %arg2[%c0_6, %c0_7, %c0_8] : memref<1x19x256xbf16, #tpu.memory_space<vmem>>, vector<1x19x256xbf16>
    %7 = vector.shape_cast %6 : vector<1x19x256xbf16> to vector<19x256xbf16>
    %cst_9 = arith.constant dense<0.000000e+00> : vector<32x256xf32>
    %8 = tpu.matmul %5, %7, %cst_9 {dimension_numbers = #tpu.dot_dimension_numbers<[1], [0], [0], [1], [0, 0, 1, 1], [], []>} : vector<32x19xbf16>, vector<19x256xbf16>, vector<32x256xf32> -> vector<32x256xf32>
    %9 = vector.broadcast %1 : vector<32x1xf32> to vector<32x256xf32>
    %10 = arith.addf %8, %9 : vector<32x256xf32>
    %c0_10 = arith.constant 0 : index
    %c0_11 = arith.constant 0 : index
    %c0_12 = arith.constant 0 : index
    %11 = vector.load %arg5[%c0_10, %c0_11, %c0_12] : memref<1x32x256xf32, #tpu.memory_space<vmem>>, vector<1x32x256xf32>
    %12 = vector.shape_cast %11 : vector<1x32x256xf32> to vector<32x256xf32>
    %13 = vector.shape_cast %10 : vector<32x256xf32> to vector<1x32x256xf32>
    tpu.vector_store %arg5[%c0_10, %c0_11, %c0_12], %13 {strides = array<i32>} : memref<1x32x256xf32, #tpu.memory_space<vmem>>, vector<1x32x256xf32>,
    return
  }
  func.func @transform_0(%arg0: i32) -> (i32, i32, i32) {
    %c0_i32 = arith.constant 0 : i32
    %c0_i32_0 = arith.constant 0 : i32
    %c0_i32_1 = arith.constant 0 : i32
    return %arg0, %c0_i32, %c0_i32_0 : i32, i32, i32
  }
  func.func @transform_1(%arg0: i32) -> (i32, i32, i32) {
    %c0_i32 = arith.constant 0 : i32
    %c0_i32_0 = arith.constant 0 : i32
    %c0_i32_1 = arith.constant 0 : i32
    return %arg0, %c0_i32, %c0_i32_0 : i32, i32, i32
  }
  func.func @transform_2(%arg0: i32) -> (i32, i32) {
    %c0_i32 = arith.constant 0 : i32
    %c0_i32_0 = arith.constant 0 : i32
    %c0_i32_1 = arith.constant 0 : i32
    return %c0_i32, %c0_i32_0 : i32, i32
  }
  func.func @transform_3(%arg0: i32) -> (i32, i32) {
    %c0_i32 = arith.constant 0 : i32
    %c0_i32_0 = arith.constant 0 : i32
    %c0_i32_1 = arith.constant 0 : i32
    return %c0_i32, %c0_i32_0 : i32, i32
  }
  func.func @transform_4(%arg0: i32) -> (i32, i32, i32) {
    %c0_i32 = arith.constant 0 : i32
    %c0_i32_0 = arith.constant 0 : i32
    %c0_i32_1 = arith.constant 0 : i32
    return %arg0, %c0_i32, %c0_i32_0 : i32, i32, i32
  }
}

</mosaic_0001>

<llo_original>
// kernel: tpu_custom_call.1
$region0: #{tpu_custom_call.1}
  #allocation0 [shape = 'u32[]', space=smem, size = 0x4, offset = 0x4, fixed_abs, tag = 'smem constant byte address 0x4 - core index']
  #allocation1 [shape = 'u32[144,128]{1,0:T(1,128)}', space=vmem, size = 0x12000, scoped, tag = 'internal scratch']
  %s0 = inlined_call_operand.vmem [shape: bf16[2,128,19], index: 0, kind: input, shape index: {}]
  %s1 = inlined_call_operand.vmem [shape: bf16[2,19,256], index: 1, kind: input, shape index: {}]
  %s2 = inlined_call_operand.vmem [shape: bf16[32,128], index: 2, kind: input, shape index: {}]
  %s3 = inlined_call_operand.vmem [shape: f32[32,1], index: 3, kind: input, shape index: {}]
  %s4 = inlined_call_operand.hbm [shape: f32[2,32,256], index: 4, kind: output, shape index: {}]
  %s5 = sld [smem:[#allocation0]]
  $region49: #{tpu_custom_call.1} parent=0
    _
  %s7 = ssub.s32 1, %s5
  %s8 = scalar_select 0, %s7, %s5
  $region1: #{tpu_custom_call.1} parent=0
    #allocation2 [shape = 'u8[65536]{0}', space=vmem, size = 0x10000, scoped, tag = 'output window, operand 0']
    #allocation3 [shape = 's32[2]{0}', space=sflag, size = 0x8, scoped, tag = 'scoped memory for tpu_custom_call.1']
    %9 = vsyncpa [#allocation3], 0
    %s10 = scalar_lea.sflag [#allocation3], 1
    %11 = vsyncpa %s10, 0
    loop: start=0, step=1, limit=4
    $region2: #{tpu_custom_call.1} parent=1 // loop_pre_header
      _
    $region3: #{tpu_custom_call.1} parent=1 // loop_header
      %s13 = sphi 0, %s17
      %p14 = scmp.ge.s32.totalorder %s13, 4
      %s23 = sphi 0, %s25
      %s26 = sphi 0, %s23
      %s27 = sphi 0, %s26
      %s43 = sphi 0, %s27
      %s49 = sphi 0, %s51
      %s52 = sphi 0, %s49
      %s53 = sphi 0, %s52
      %s69 = sphi 0, %s53
      %s73 = sphi 0, %s73
      %s75 = sphi 0, %s73
      %s76 = sphi 0, %s75
      %s90 = sphi 0, %s76
      %s94 = sphi 0, %s94
      %s96 = sphi 0, %s94
      %s97 = sphi 0, %s96
      %s111 = sphi 0, %s97
      %s117 = sphi 0, %s119
      %s120 = sphi 0, %s117
      %s121 = sphi 0, %s120
      %s137 = sphi 0, %s121
    $region4: #{tpu_custom_call.1} parent=1 // loop_header_branch
      %16 = sbr.rel (%p14) target = $region8
    $region5: #{tpu_custom_call.1} parent=1 // loop_body
      %s18 = ssub.s32 %s13, 1
      %s19 = ssub.s32 %s13, 2
      %s20 = sadd.s32 %s13, 1
      %s21 = ssub.s32 %s13, %s20
      %p22 = scmp.eq.s32.totalorder %s21, 0
      %s24 = sadd.s32 %s23, 1
      %s25 = scalar_select %p22, %s23, %s24
      %p28 = pneg %p22
      %p29 = scmp.eq.s32.totalorder %s13, 1
      %p30 = por %p28, %p29
      %p31 = scmp.ne.s32.totalorder %s23, %s26
      %p32 = scmp.eq.s32.totalorder %s13, 0
      %p33 = por %p31, %p32
      %p34 = scmp.ne.s32.totalorder %s23, %s26
      %p35 = scmp.eq.s32.totalorder %s18, 1
      %p36 = por %p34, %p35
      %p37 = scmp.ne.s32.totalorder %s26, %s27
      %p38 = scmp.eq.s32.totalorder %s18, 0
      %p39 = por %p37, %p38
      %p40 = scmp.ne.s32.totalorder %s26, %s27
      %p41 = scmp.eq.s32.totalorder %s19, 1
      %p42 = por %p40, %p41
      %p44 = scmp.ne.s32.totalorder %s27, %s43
      %p45 = scmp.eq.s32.totalorder %s19, 0
      %p46 = por %p44, %p45
      %s47 = ssub.s32 %s13, %s20
      %p48 = scmp.eq.s32.totalorder %s47, 0
      %s50 = sadd.s32 %s49, 1
      %s51 = scalar_select %p48, %s49, %s50
      %p54 = pneg %p48
      %p55 = scmp.eq.s32.totalorder %s13, 1
      %p56 = por %p54, %p55
      %p57 = scmp.ne.s32.totalorder %s49, %s52
      %p58 = scmp.eq.s32.totalorder %s13, 0
      %p59 = por %p57, %p58
      %p60 = scmp.ne.s32.totalorder %s49, %s52
      %p61 = scmp.eq.s32.totalorder %s18, 1
      %p62 = por %p60, %p61
      %p63 = scmp.ne.s32.totalorder %s52, %s53
      %p64 = scmp.eq.s32.totalorder %s18, 0
      %p65 = por %p63, %p64
      %p66 = scmp.ne.s32.totalorder %s52, %s53
      %p67 = scmp.eq.s32.totalorder %s19, 1
      %p68 = por %p66, %p67
      %p70 = scmp.ne.s32.totalorder %s53, %s69
      %p71 = scmp.eq.s32.totalorder %s19, 0
      %p72 = por %p70, %p71
      %s74 = sadd.s32 %s73, 1
      %p77 = scmp.eq.s32.totalorder %s13, 1
      %p78 = scmp.ne.s32.totalorder %s73, %s75
      %p79 = scmp.eq.s32.totalorder %s13, 0
      %p80 = por %p78, %p79
      %p81 = scmp.ne.s32.totalorder %s73, %s75
      %p82 = scmp.eq.s32.totalorder %s18, 1
      %p83 = por %p81, %p82
      %p84 = scmp.ne.s32.totalorder %s75, %s76
      %p85 = scmp.eq.s32.totalorder %s18, 0
      %p86 = por %p84, %p85
      %p87 = scmp.ne.s32.totalorder %s75, %s76
      %p88 = scmp.eq.s32.totalorder %s19, 1
      %p89 = por %p87, %p88
      %p91 = scmp.ne.s32.totalorder %s76, %s90
      %p92 = scmp.eq.s32.totalorder %s19, 0
      %p93 = por %p91, %p92
      %s95 = sadd.s32 %s94, 1
      %p98 = scmp.eq.s32.totalorder %s13, 1
      %p99 = scmp.ne.s32.totalorder %s94, %s96
      %p100 = scmp.eq.s32.totalorder %s13, 0
      %p101 = por %p99, %p100
      %p102 = scmp.ne.s32.totalorder %s94, %s96
      %p103 = scmp.eq.s32.totalorder %s18, 1
      %p104 = por %p102, %p103
      %p105 = scmp.ne.s32.totalorder %s96, %s97
      %p106 = scmp.eq.s32.totalorder %s18, 0
      %p107 = por %p105, %p106
      %p108 = scmp.ne.s32.totalorder %s96, %s97
      %p109 = scmp.eq.s32.totalorder %s19, 1
      %p110 = por %p108, %p109
      %p112 = scmp.ne.s32.totalorder %s97, %s111
      %p113 = scmp.eq.s32.totalorder %s19, 0
      %p114 = por %p112, %p113
      %s115 = ssub.s32 %s13, %s20
      %p116 = scmp.eq.s32.totalorder %s115, 0
      %s118 = sadd.s32 %s117, 1
      %s119 = scalar_select %p116, %s117, %s118
      %p122 = pneg %p116
      %p123 = scmp.eq.s32.totalorder %s13, 1
      %p124 = por %p122, %p123
      %p125 = scmp.ne.s32.totalorder %s117, %s120
      %p126 = scmp.eq.s32.totalorder %s13, 0
      %p127 = por %p125, %p126
      %p128 = scmp.ne.s32.totalorder %s117, %s120
      %p129 = scmp.eq.s32.totalorder %s18, 1
      %p130 = por %p128, %p129
      %p131 = scmp.ne.s32.totalorder %s120, %s121
      %p132 = scmp.eq.s32.totalorder %s18, 0
      %p133 = por %p131, %p132
      %p134 = scmp.ne.s32.totalorder %s120, %s121
      %p135 = scmp.eq.s32.totalorder %s19, 1
      %p136 = por %p134, %p135
      %p138 = scmp.ne.s32.totalorder %s121, %s137
      %p139 = scmp.eq.s32.totalorder %s19, 0
      %p140 = por %p138, %p139
      %p141 = scmp.le.s32.totalorder 1, %s13
      %p142 = scmp.lt.s32.totalorder %s13, 3
      %p143 = pnand %p141, %p142
      %p144 = pneg %p143
      // Predicated region
      $region9: #{tpu_custom_call.1} parent=5 // pred_check
        _
      $region10: #{tpu_custom_call.1} parent=5 // pred_check_branch
        %146 = sbr.rel (%p143) target = $region12
      $region11: #{tpu_custom_call.1} parent=5 // pred_region
        %s147 = ssub.s32 %s13, 1
        // Predicated region
        $region13: #{tpu_custom_call.1} parent=11 // pred_check
          %p148 = pneg %p86
        $region14: #{tpu_custom_call.1} parent=11 // pred_check_branch
          %150 = sbr.rel (%p148) target = $region16
        $region15: #{tpu_custom_call.1} parent=11 // pred_region
          _
        $region16: #{tpu_custom_call.1} parent=11 // pred_fallthru
          _
        // Predicated region
        $region17: #{tpu_custom_call.1} parent=11 // pred_check
          %p151 = pneg %p107
        $region18: #{tpu_custom_call.1} parent=11 // pred_check_branch
          %153 = sbr.rel (%p151) target = $region20
        $region19: #{tpu_custom_call.1} parent=11 // pred_region
          _
        $region20: #{tpu_custom_call.1} parent=11 // pred_fallthru
          _
      $region12: #{tpu_custom_call.1} parent=5 // pred_fallthru
        _
      %p154 = scmp.lt.s32.totalorder %s13, 2
      // Predicated region
      $region21: #{tpu_custom_call.1} parent=5 // pred_check
        %p155 = pneg %p154
      $region22: #{tpu_custom_call.1} parent=5 // pred_check_branch
        %157 = sbr.rel (%p155) target = $region24
      $region23: #{tpu_custom_call.1} parent=5 // pred_region
        // Predicated region
        $region25: #{tpu_custom_call.1} parent=23 // pred_check
          %p158 = pneg %p33
        $region26: #{tpu_custom_call.1} parent=23 // pred_check_branch
          %160 = sbr.rel (%p158) target = $region28
        $region27: #{tpu_custom_call.1} parent=23 // pred_region
          %p161 = scmp.lt.s32.totalorder %s13, 1
          %s162 = scalar_select %p161, %s13, 1
          %s163 = smul.addr %s162, 16
          %s164 = smul.addr %s163, 4
          %s165 = scalar_lea.vmem %s0, %s164
        $region28: #{tpu_custom_call.1} parent=23 // pred_fallthru
          _
        // Predicated region
        $region29: #{tpu_custom_call.1} parent=23 // pred_check
          %p166 = pneg %p59
        $region30: #{tpu_custom_call.1} parent=23 // pred_check_branch
          %168 = sbr.rel (%p166) target = $region32
        $region31: #{tpu_custom_call.1} parent=23 // pred_region
          %p169 = scmp.lt.s32.totalorder %s13, 1
          %s170 = scalar_select %p169, %s13, 1
          %s171 = smul.addr %s170, 6
          %s172 = smul.addr %s171, 4
          %s173 = scalar_lea.vmem %s1, %s172
        $region32: #{tpu_custom_call.1} parent=23 // pred_fallthru
          _
      $region24: #{tpu_custom_call.1} parent=5 // pred_fallthru
        _
      %p174 = scmp.le.s32.totalorder 1, %s13
      %p175 = scmp.lt.s32.totalorder %s13, 3
      %p176 = pnand %p174, %p175
      %p177 = pneg %p176
      // Predicated region
      $region33: #{tpu_custom_call.1} parent=5 // pred_check
        _
      $region34: #{tpu_custom_call.1} parent=5 // pred_check_branch
        %179 = sbr.rel (%p176) target = $region36
      $region35: #{tpu_custom_call.1} parent=5 // pred_region
        %s180 = ssub.s32 %s13, 1
        %p181 = scmp.lt.s32.totalorder %s18, 1
        %s182 = scalar_select %p181, %s18, 1
        %s183 = smul.addr %s182, 16
        %s184 = smul.addr %s183, 4
        %s185 = scalar_lea.vmem %s0, %s184
        %p186 = pneg %p39
        %p187 = pneg %p36
        %p188 = scmp.lt.s32.totalorder %s18, 1
        %s189 = scalar_select %p188, %s18, 1
        %s190 = smul.addr %s189, 6
        %s191 = smul.addr %s190, 4
        %s192 = scalar_lea.vmem %s1, %s191
        %p193 = pneg %p65
        %p194 = pneg %p62
        %p195 = pneg %p86
        %p196 = pneg %p83
        %p197 = pneg %p107
        %p198 = pneg %p104
        %p199 = pneg %p133
        %p200 = pneg %p130
        %s201 = sand.u32 %s120, 1
        %s202 = scalar_lea.sflag [#allocation3], %s201
        %s203 = sand.u32 %s120, 1
        %s204 = smul.addr %s203, 64
        %s205 = scalar_lea.vmem [#allocation2], %s204
        %p206 = scmp.lt.s32.totalorder %s18, 1
        %s207 = scalar_select %p206, %s18, 1
        %s208 = smul.addr %s207, 16
        %s209 = smul.addr %s208, 4
        %s210 = scalar_lea.vmem %s0, %s209
        %p211 = scmp.lt.s32.totalorder %s18, 1
        %s212 = scalar_select %p211, %s18, 1
        %s213 = smul.addr %s212, 6
        %s214 = smul.addr %s213, 4
        %s215 = scalar_lea.vmem %s1, %s214
        %v217 = vld [vmem:[%s2] sm:$0xf]
        %v218 = vld [vmem:[%s2 + $0x4] sm:$0xf]
        %v219 = vld [vmem:[%s2 + $0x8] sm:$0xf]
        %v220 = vld [vmem:[%s2 + $0xc] sm:$0xf]
        %v221 = vld [vmem:[%s3] sm:$0xff]
        %v222 = vld [vmem:[%s3 + $0x8] sm:$0xff]
        %v223 = vld [vmem:[%s3 + $0x10] sm:$0xff]
        %v224 = vld [vmem:[%s3 + $0x18] sm:$0xff]
        %v225 = vld [vmem:[%s210] sm:$0xf]
        %v226 = vld [vmem:[%s210 + $0x4] sm:$0xf]
        %v227 = vld [vmem:[%s210 + $0x8] sm:$0xf]
        %v228 = vld [vmem:[%s210 + $0xc] sm:$0xf]
        %v229 = vld [vmem:[%s210 + $0x10] sm:$0xf]
        %v230 = vld [vmem:[%s210 + $0x14] sm:$0xf]
        %v231 = vld [vmem:[%s210 + $0x18] sm:$0xf]
        %v232 = vld [vmem:[%s210 + $0x1c] sm:$0xf]
        %v233 = vld [vmem:[%s210 + $0x20] sm:$0xf]
        %v234 = vld [vmem:[%s210 + $0x24] sm:$0xf]
        %v235 = vld [vmem:[%s210 + $0x28] sm:$0xf]
        %v236 = vld [vmem:[%s210 + $0x2c] sm:$0xf]
        %v237 = vld [vmem:[%s210 + $0x30] sm:$0xf]
        %v238 = vld [vmem:[%s210 + $0x34] sm:$0xf]
        %v239 = vld [vmem:[%s210 + $0x38] sm:$0xf]
        %v240 = vld [vmem:[%s210 + $0x3c] sm:$0xf]
        %v245 = vunpack.c.l.b16 %v217
        %v246 = vunpack.c.l.b16 %v218
        %v247 = vunpack.c.l.b16 %v219
        %v248 = vunpack.c.l.b16 %v220
        %v249 = vpack.c.b16 %v246, %v245
        %v250 = vpack.c.b16 %v248, %v247
        %v269 = vunpack.c.l.b16 %v225
        %v270 = vunpack.c.l.b16 %v226
        %v271 = vunpack.c.l.b16 %v227
        %v272 = vunpack.c.l.b16 %v228
        %v273 = vunpack.c.l.b16 %v229
        %v274 = vunpack.c.l.b16 %v230
        %v275 = vunpack.c.l.b16 %v231
        %v276 = vunpack.c.l.b16 %v232
        %v277 = vunpack.c.l.b16 %v233
        %v278 = vunpack.c.l.b16 %v234
        %v279 = vunpack.c.l.b16 %v235
        %v280 = vunpack.c.l.b16 %v236
        %v281 = vunpack.c.l.b16 %v237
        %v282 = vunpack.c.l.b16 %v238
        %v283 = vunpack.c.l.b16 %v239
        %v284 = vunpack.c.l.b16 %v240
        %v285 = vpack.c.b16 %v270, %v269
        %v286 = vpack.c.b16 %v272, %v271
        %v287 = vpack.c.b16 %v274, %v273
        %v288 = vpack.c.b16 %v276, %v275
        %v289 = vpack.c.b16 %v278, %v277
        %v290 = vpack.c.b16 %v280, %v279
        %v291 = vpack.c.b16 %v282, %v281
        %v292 = vpack.c.b16 %v284, %v283
        %301 = vmatprep.subr.bf16.mxu0 0
        %302 = vmatpush1.bf16.msra.mxu0 %v285
        %303 = vmatprep.subr.bf16.mxu0 0
        %304 = vmatpush1.bf16.msra.mxu0 %v286
        %305 = vmatprep.subr.bf16.mxu0 0
        %306 = vmatpush1.bf16.msra.mxu0 %v287
        %307 = vmatprep.subr.bf16.mxu0 0
        %308 = vmatpush1.bf16.msra.mxu0 %v288
        %309 = vmatprep.subr.bf16.mxu0 0
        %310 = vmatpush1.bf16.msra.mxu0 %v289
        %311 = vmatprep.subr.bf16.mxu0 0
        %312 = vmatpush1.bf16.msra.mxu0 %v290
        %313 = vmatprep.subr.bf16.mxu0 0
        %314 = vmatpush1.bf16.msra.mxu0 %v291
        %315 = vmatprep.subr.bf16.mxu0 0
        %316 = vmatpush1.bf16.msra.mxu0 %v292
        %317 = vmatprep.subr.bf16.mxu0 0
        %318 = vmatpush1.bf16.msra.mxu0 0
        %319 = vmatprep.subr.bf16.mxu0 0
        %320 = vmatpush1.bf16.msra.mxu0 0
        %321 = vmatprep.subr.bf16.mxu0 0
        %322 = vmatpush1.bf16.msra.mxu0 0
        %323 = vmatprep.subr.bf16.mxu0 0
        %324 = vmatpush1.bf16.msra.mxu0 0
        %325 = vmatprep.subr.bf16.mxu0 0
        %326 = vmatpush1.bf16.msra.mxu0 0
        %327 = vmatprep.subr.bf16.mxu0 0
        %328 = vmatpush1.bf16.msra.mxu0 0
        %329 = vmatprep.subr.bf16.mxu0 0
        %330 = vmatpush1.bf16.msra.mxu0 0
        %331 = vmatprep.subr.bf16.mxu0 0
        %332 = vmatpush1.bf16.msra.mxu0 0
        %333 = vmatprep.mubr.bf16.mxu0 0
        %334 = vmatmul.mubr.bf16.gmra.mrb[0].mxu0 %v249
        %v335 = vpop.f32.mrb[0].mxu0
        %v336 = vadd.f32 0.0, %v335
        %v337 = vpop.f32.mrb[0].mxu0
        %v338 = vpop.f32.mrb[0].mxu0
        %v339 = vadd.f32 0.0, %v338
        %v340 = vpop.f32.mrb[0].mxu0
        %341 = vmatprep.mubr.bf16.mxu0 0
        %342 = vmatmul.mubr.bf16.gmra.mrb[0].mxu0 %v250
        %v343 = vpop.f32.mrb[0].mxu0
        %v344 = vadd.f32 0.0, %v343
        %v345 = vpop.f32.mrb[0].mxu0
        %v346 = vpop.f32.mrb[0].mxu0
        %v347 = vadd.f32 0.0, %v346
        %v348 = vpop.f32.mrb[0].mxu0
        %349 = vdwg.mxu0
        %v350 = vpack.c.bf16 %v339, %v336
        %v351 = vpack.c.bf16 %v347, %v344
        %v352 = vld [vmem:[%s215] sm:$0xff]
        %v353 = vld [vmem:[%s215 + $0x8] sm:$0xff]
        %v354 = vld [vmem:[%s215 + $0x10] sm:$0x33]
        %356 = vset.pattern.permute.xlu0 0
        %357 = vperm.xlu0 %356, %v221
        %v358 = vpop.permute.xlu0 %357
        %361 = vset.pattern.permute.xlu0 0
        %362 = vperm.xlu0 %361, %v222
        %v363 = vpop.permute.xlu0 %362
        %366 = vset.pattern.permute.xlu0 0
        %367 = vperm.xlu0 %366, %v223
        %v368 = vpop.permute.xlu0 %367
        %371 = vset.pattern.permute.xlu0 0
        %372 = vperm.xlu0 %371, %v224
        %v373 = vpop.permute.xlu0 %372
        %v378 = vunpack.c.l.b16 %v352
        %v379 = vunpack.c.h.b16 %v352
        %v380 = vunpack.c.l.b16 %v353
        %v381 = vunpack.c.h.b16 %v353
        %v382 = vunpack.c.l.b16 %v354
        %v383 = vunpack.c.h.b16 %v354
        %v384 = vpack.c.b16 %v380, %v378
        %v385 = vpack.c.b16 %v381, %v379
        %v386 = vpack.c.b16 %v382, %v382
        %v387 = vpack.c.b16 %v383, %v383
        %vm390 = vcmask 154624
        %v392 = vsel %vm390, %v350, 0
        %v395 = vsel %vm390, %v351, 0
        %vm397 = vcmask 1040384
        %vm398 = vcmask 1041408
        %v399 = vsel %vm397, 4294967295, 65535
        %v400 = vsel %vm398, %v399, 0
        %v402 = vand.u32 %v386, %v400
        %v405 = vand.u32 %v387, %v400
        %407 = vmatprep.subr.bf16.mxu0 %v385
        %408 = vmatpush1.bf16.msra.mxu0 %v384
        %409 = vmatprep.subr.bf16.mxu0 %v405
        %410 = vmatpush1.bf16.msra.mxu0 %v402
        %411 = vmatprep.subr.bf16.mxu0 0
        %412 = vmatpush1.bf16.msra.mxu0 0
        %413 = vmatprep.subr.bf16.mxu0 0
        %414 = vmatpush1.bf16.msra.mxu0 0
        %415 = vmatprep.subr.bf16.mxu0 0
        %416 = vmatpush1.bf16.msra.mxu0 0
        %417 = vmatprep.subr.bf16.mxu0 0
        %418 = vmatpush1.bf16.msra.mxu0 0
        %419 = vmatprep.subr.bf16.mxu0 0
        %420 = vmatpush1.bf16.msra.mxu0 0
        %421 = vmatprep.subr.bf16.mxu0 0
        %422 = vmatpush1.bf16.msra.mxu0 0
        %423 = vmatprep.subr.bf16.mxu0 0
        %424 = vmatpush1.bf16.msra.mxu0 0
        %425 = vmatprep.subr.bf16.mxu0 0
        %426 = vmatpush1.bf16.msra.mxu0 0
        %427 = vmatprep.subr.bf16.mxu0 0
        %428 = vmatpush1.bf16.msra.mxu0 0
        %429 = vmatprep.subr.bf16.mxu0 0
        %430 = vmatpush1.bf16.msra.mxu0 0
        %431 = vmatprep.subr.bf16.mxu0 0
        %432 = vmatpush1.bf16.msra.mxu0 0
        %433 = vmatprep.subr.bf16.mxu0 0
        %434 = vmatpush1.bf16.msra.mxu0 0
        %435 = vmatprep.subr.bf16.mxu0 0
        %436 = vmatpush1.bf16.msra.mxu0 0
        %437 = vmatprep.subr.bf16.mxu0 0
        %438 = vmatpush1.bf16.msra.mxu0 0
        %439 = vmatprep.mubr.bf16.mxu0 0
        %440 = vmatmul.mubr.bf16.gmra.mrb[0].mxu0 %v392
        %v441 = vpop.f32.mrb[0].mxu0
        %v442 = vadd.f32 %v358, %v441
        %v443 = vpop.f32.mrb[0].mxu0
        %v444 = vadd.f32 %v358, %v443
        %v445 = vpop.f32.mrb[0].mxu0
        %v446 = vadd.f32 %v363, %v445
        %v447 = vpop.f32.mrb[0].mxu0
        %v448 = vadd.f32 %v363, %v447
        %449 = vmatprep.mubr.bf16.mxu0 0
        %450 = vmatmul.mubr.bf16.gmra.mrb[0].mxu0 %v395
        %v451 = vpop.f32.mrb[0].mxu0
        %v452 = vadd.f32 %v368, %v451
        %v453 = vpop.f32.mrb[0].mxu0
        %v454 = vadd.f32 %v368, %v453
        %v455 = vpop.f32.mrb[0].mxu0
        %v456 = vadd.f32 %v373, %v455
        %v457 = vpop.f32.mrb[0].mxu0
        %v458 = vadd.f32 %v373, %v457
        %459 = vdwg.mxu0
        %460 = vst [vmem:[%s205] sm:$0xff] %v442
        %461 = vst [vmem:[%s205 + $0x8] sm:$0xff] %v444
        %462 = vst [vmem:[%s205 + $0x10] sm:$0xff] %v446
        %463 = vst [vmem:[%s205 + $0x18] sm:$0xff] %v448
        %464 = vst [vmem:[%s205 + $0x20] sm:$0xff] %v452
        %465 = vst [vmem:[%s205 + $0x28] sm:$0xff] %v454
        %466 = vst [vmem:[%s205 + $0x30] sm:$0xff] %v456
        %467 = vst [vmem:[%s205 + $0x38] sm:$0xff] %v458
        %s468 = sand.u32 %s120, 1
        %s469 = scalar_lea.sflag [#allocation3], %s468
        %s470 = sand.u32 %s120, 1
        %s471 = smul.addr %s470, 64
        %s472 = scalar_lea.vmem [#allocation2], %s471
        // Predicated region
        $region37: #{tpu_custom_call.1} parent=35 // pred_check
          %p473 = pneg %p130
        $region38: #{tpu_custom_call.1} parent=35 // pred_check_branch
          %475 = sbr.rel (%p473) target = $region40
        $region39: #{tpu_custom_call.1} parent=35 // pred_region
          %s477 = ssub.s32 1024, 1024
          %478 = vsyncadd %s469, %s477
          %s479 = smul.addr %s18, 8
          %s480 = smul.addr %s479, 128
          %s481 = scalar_lea.hbm %s4, %s480
          %s482 = sshll.u32 %s472, 4
          %s483 = int_to_ptr.vmem [resolvable:$true] %s482
          %488 = dma.vmem_to_hbm [thread:$0]  %s483, 1024, %s481, %s469, 256, 256, 16
        $region40: #{tpu_custom_call.1} parent=35 // pred_fallthru
          _
      $region36: #{tpu_custom_call.1} parent=5 // pred_fallthru
        _
      %p489 = scmp.le.s32.totalorder 2, %s13
      // Predicated region
      $region41: #{tpu_custom_call.1} parent=5 // pred_check
        %p490 = pneg %p489
      $region42: #{tpu_custom_call.1} parent=5 // pred_check_branch
        %492 = sbr.rel (%p490) target = $region44
      $region43: #{tpu_custom_call.1} parent=5 // pred_region
        %s493 = ssub.s32 %s13, 2
        // Predicated region
        $region45: #{tpu_custom_call.1} parent=43 // pred_check
          %p494 = pneg %p136
        $region46: #{tpu_custom_call.1} parent=43 // pred_check_branch
          %496 = sbr.rel (%p494) target = $region48
        $region47: #{tpu_custom_call.1} parent=43 // pred_region
          %s497 = sand.u32 %s121, 1
          %s498 = scalar_lea.sflag [#allocation3], %s497
          %s499 = sand.u32 %s121, 1
          %s500 = smul.addr %s499, 64
          %s501 = scalar_lea.vmem [#allocation2], %s500
          %502 = dma.done %s498, 1024
        $region48: #{tpu_custom_call.1} parent=43 // pred_fallthru
          _
      $region44: #{tpu_custom_call.1} parent=5 // pred_fallthru
        _
    $region6: #{tpu_custom_call.1} parent=1 // loop_footer
      %s17 = sadd.s32 1, %s13
    $region7: #{tpu_custom_call.1} parent=1 // loop_footer_branch
      %12 = sbr.rel target = $region3
    $region8: #{tpu_custom_call.1} parent=1 // loop_exit
      _
    %503 = vsyncpa [#allocation3], 1
    %s504 = scalar_lea.sflag [#allocation3], 1
    %505 = vsyncpa %s504, 1

</llo_original>
